<compile_context>
chip_gen: v5e
topology: v5e:2x2
jax: 0.10.0
libtpu: 0.0.40
codegen_flags: <defaults>
</compile_context>

<pallas_src>
import functools

import jax
import jax.numpy as jnp
from jax.experimental import pallas as pl
from jax.experimental.pallas import tpu as pltpu


def _feature_resizer_kernel(x_ref, w_ref, p_ref, o_ref, *, eps, do_ln, precision):
    # x_ref: (tm, C1)  input rows (ragged last block: OOB rows are garbage, stores dropped)
    # w_ref: (C1, C2)  fc weight, pre-transposed once in the wrapper (grid-invariant)
    # p_ref: (3, C2)   packed [fc_bias, ln_gamma, ln_beta] in f32 (grid-invariant)
    # o_ref: (tm, C2)  output rows
    x = x_ref[...]
    w = w_ref[...]
    if x.dtype != w.dtype:              # optional bf16-weight path
        x = x.astype(w.dtype)

    # y = x @ W^T (weight already transposed): MXU with f32 accumulation.
    y = jax.lax.dot_general(
        x, w,
        dimension_numbers=(((1,), (0,)), ((), ())),
        preferred_element_type=jnp.float32,
        precision=precision,
    )
    p = p_ref[...]
    y = y + p[0:1, :]                    # + fc bias

    if do_ln:
        inv_c2 = 1.0 / y.shape[-1]
        mean = jnp.sum(y, axis=-1, keepdims=True) * inv_c2
        yc = y - mean
        var = jnp.sum(yc * yc, axis=-1, keepdims=True) * inv_c2   # two-pass (stable)
        y = yc * jax.lax.rsqrt(var + eps) * p[1:2, :] + p[2:3, :]

    # Dropout (eval) == identity.
    # TODO(synk): training-mode dropout (pltpu.prng_random_bits mask) not implemented.
    o_ref[...] = y.astype(o_ref.dtype)


def prepare_feature_resizer_params(fc_weight, fc_bias, ln_weight=None, ln_bias=None,
                                   *, do_ln=True, weight_dtype=None):
    """One-time parameter prep (hoist out of the per-call hot path):
    transpose the torch-layout (C2, C1) weight to (C1, C2) and pack
    [bias, gamma, beta] into a single (3, C2) f32 operand."""
    c2 = fc_weight.shape[0]
    w_t = fc_weight.T
    if weight_dtype is not None:
        w_t = w_t.astype(weight_dtype)
    bias = fc_bias.astype(jnp.float32).reshape(1, c2)
    if do_ln:
        if ln_weight is None or ln_bias is None:
            raise ValueError("do_ln=True requires ln_weight and ln_bias")
        gamma = ln_weight.astype(jnp.float32).reshape(1, c2)
        beta = ln_bias.astype(jnp.float32).reshape(1, c2)
    else:
        gamma = jnp.ones((1, c2), jnp.float32)   # unused in the kernel
        beta = jnp.zeros((1, c2), jnp.float32)
    return w_t, jnp.concatenate([bias, gamma, beta], axis=0)


def _default_vmem_limit():
    try:
        cap = int(getattr(pltpu.get_tpu_info(), "vmem_capacity_bytes", 0)) or (64 << 20)
    except Exception:
        cap = 64 << 20                            # conservative (v7x per-TC VMEM)
    # ~96 MiB on v5e/v6e (128 MiB physical), ~54 MiB on v7x (64 MiB physical).
    return max(32 << 20, min(96 << 20, int(cap * 0.85)))


def _pick_tm(n, c1, c2, x_itemsize, w_itemsize, vmem_limit_bytes):
    sublane = {4: 8, 2: 16, 1: 32}.get(x_itemsize, 8)
    c1_l = -(-c1 // 128) * 128
    c2_l = -(-c2 // 128) * 128
    budget = int(vmem_limit_bytes * 0.75)             # headroom for compiler scratch/spill
    fixed = 2 * (-(-c1 // 8) * 8) * c2_l * w_itemsize  # weight (double-buffered)
    fixed += 2 * 8 * c2_l * 4                           # packed params
    per_row = (2 * c1_l * x_itemsize                    # x tile (double-buffered)
               + 2 * c2_l * x_itemsize                  # out tile (double-buffered)
               + 3 * c2_l * 4)                          # f32 intermediates (y, yc, temps)
    # TODO(synk): weights too large for the budget would need a K grid axis with an f32
    # accumulator scratch; not needed for FeatureResizer-sized layers.
    target = 2048 if x_itemsize >= 4 else 4096
    tm = min(target, max(sublane, (budget - fixed) // max(per_row, 1)))
    if n > 2 * sublane:
        # Keep >=2 grid steps when possible so both TensorCores get work on v7x.
        half = -(-n // 2)
        tm = min(tm, -(-half // sublane) * sublane)
    tm = max(sublane, (int(tm) // sublane) * sublane)
    tm = min(tm, -(-n // sublane) * sublane)
    return tm


def feature_resizer_apply(x, w_t, params, *, do_ln=True, eps=1e-12, tm=None,
                          vmem_limit_bytes=None, precision=None):
    """x: (..., C1). w_t: (C1, C2) pre-transposed fc weight. params: (3, C2) f32."""
    orig_shape = x.shape
    c1, c2 = w_t.shape
    x2d = x.reshape(-1, c1)
    n = x2d.shape[0]

    if vmem_limit_bytes is None:
        vmem_limit_bytes = _default_vmem_limit()

    x_itemsize = jnp.dtype(x.dtype).itemsize
    w_itemsize = jnp.dtype(w_t.dtype).itemsize
    sublane = {4: 8, 2: 16, 1: 32}.get(x_itemsize, 8)
    if tm is None:
        tm = _pick_tm(n, c1, c2, x_itemsize, w_itemsize, vmem_limit_bytes)
    else:
        tm = max(sublane, (int(tm) // sublane) * sublane)
        tm = min(tm, -(-n // sublane) * sublane)

    if precision is None:
        # Match torch f32 Linear semantics: full-precision MXU passes for f32 operands.
        precision = (jax.lax.Precision.HIGHEST
                     if (x.dtype == jnp.float32 and w_t.dtype == jnp.float32)
                     else jax.lax.Precision.DEFAULT)

    # Ragged grid: the last block may extend past n; OOB rows are garbage on read and
    # their stores are dropped.  Safe because every row is computed independently.
    grid = (pl.cdiv(n, tm),)

    out = pl.pallas_call(
        functools.partial(_feature_resizer_kernel, eps=eps, do_ln=do_ln,
                          precision=precision),
        out_shape=jax.ShapeDtypeStruct((n, c2), x.dtype),
        grid_spec=pltpu.PrefetchScalarGridSpec(
            num_scalar_prefetch=0,
            grid=grid,
            in_specs=[
                pl.BlockSpec((tm, c1), lambda i: (i, 0)),
                pl.BlockSpec((c1, c2), lambda i: (0, 0)),   # grid-invariant weight
                pl.BlockSpec((3, c2), lambda i: (0, 0)),    # grid-invariant params
            ],
            out_specs=pl.BlockSpec((tm, c2), lambda i: (i, 0)),
        ),
        compiler_params=pltpu.CompilerParams(
            dimension_semantics=("parallel",),
            vmem_limit_bytes=vmem_limit_bytes,
        ),
    )(x2d, w_t, params)

    return out.reshape(*orig_shape[:-1], c2)


def feature_resizer(x, fc_weight, fc_bias, ln_weight=None, ln_bias=None, *,
                    do_ln=True, eps=1e-12, tm=None, vmem_limit_bytes=None,
                    precision=None, weight_dtype=None):
    """Convenience wrapper. fc_weight is torch Linear layout (C2, C1). Returns (..., C2)."""
    w_t, params = prepare_feature_resizer_params(
        fc_weight, fc_bias, ln_weight, ln_bias, do_ln=do_ln, weight_dtype=weight_dtype)
    return feature_resizer_apply(x, w_t, params, do_ln=do_ln, eps=eps, tm=tm,
                                 vmem_limit_bytes=vmem_limit_bytes, precision=precision)


def _reference(x, fc_weight, fc_bias, ln_weight, ln_bias, do_ln=True, eps=1e-12):
    y = jnp.einsum("...i,oi->...o", x, fc_weight, precision="highest") + fc_bias
    if not do_ln:
        return y
    mean = jnp.mean(y, axis=-1, keepdims=True)
    var = jnp.mean((y - mean) ** 2, axis=-1, keepdims=True)
    return (y - mean) * jax.lax.rsqrt(var + eps) * ln_weight + ln_bias


if __name__ == "__main__":
    key = jax.random.PRNGKey(0)
    k_x, k_w, k_b, k_g, k_be, k_x2 = jax.random.split(key, 6)

    batch, seq = 2, 8
    c1, c2 = 128, 256        # small, lane-aligned C2 -> lane-dense stores, no slicing

    x = jax.random.normal(k_x, (batch, seq, c1), dtype=jnp.float32)
    # torch Linear weight layout: (out, in)
    fc_weight = jax.random.normal(k_w, (c2, c1), dtype=jnp.float32) * 0.05
    fc_bias = jax.random.normal(k_b, (c2,), dtype=jnp.float32) * 0.01
    ln_weight = 1.0 + 0.1 * jax.random.normal(k_g, (c2,), dtype=jnp.float32)
    ln_bias = 0.1 * jax.random.normal(k_be, (c2,), dtype=jnp.float32)

    ref = _reference(x, fc_weight, fc_bias, ln_weight, ln_bias)

    # 1) Main path (do_ln=True), auto tile size (single grid step here).
    out = jax.block_until_ready(
        feature_resizer(x, fc_weight, fc_bias, ln_weight, ln_bias))
    assert out.shape == (batch, seq, c2)
    assert jnp.allclose(out, ref, atol=1e-3, rtol=1e-3), "mismatch (do_ln=True)"

    # 2) Multi-step grid (tm=8 -> 2 steps): exercises the pipelined path.
    out_t = jax.block_until_ready(
        feature_resizer(x, fc_weight, fc_bias, ln_weight, ln_bias, tm=8))
    assert jnp.allclose(out_t, ref, atol=1e-3, rtol=1e-3), "mismatch (tm=8)"

    # 3) Ragged N (15 rows, tm=8 -> last block partial) without any padding/slicing.
    x_rag = jax.random.normal(k_x2, (3, 5, c1), dtype=jnp.float32)
    ref_r = _reference(x_rag, fc_weight, fc_bias, ln_weight, ln_bias)
    out_r = jax.block_until_ready(
        feature_resizer(x_rag, fc_weight, fc_bias, ln_weight, ln_bias, tm=8))
    assert out_r.shape == (3, 5, c2)
    assert jnp.allclose(out_r, ref_r, atol=1e-3, rtol=1e-3), "mismatch (ragged N)"

    # 4) do_ln=False bypass (Linear + bias only).
    ref_nl = _reference(x, fc_weight, fc_bias, ln_weight, ln_bias, do_ln=False)
    out_nl = jax.block_until_ready(feature_resizer(x, fc_weight, fc_bias, do_ln=False))
    assert jnp.allclose(out_nl, ref_nl, atol=1e-3, rtol=1e-3), "mismatch (do_ln=False)"

    print("KERNEL_OK")
</pallas_src>

<mosaic_0001>
module attributes {stable_mosaic.version = 11 : i64} {
  func.func @_feature_resizer_kernel(%arg0: i32, %arg1: memref<16x128xf32, #tpu.memory_space<vmem>>, %arg2: memref<128x256xf32, #tpu.memory_space<vmem>>, %arg3: memref<3x256xf32, #tpu.memory_space<vmem>>, %arg4: memref<16x256xf32, #tpu.memory_space<vmem>>) attributes {dimension_semantics = [#tpu.dimension_semantics<parallel>], iteration_bounds = array<i64: 1>, scalar_prefetch = 0 : i64, scratch_operands = 0 : i64, tpu.core_type = #tpu.core_type<tc>, window_params = [{transform_indices = @transform_0, window_bounds = array<i64: 16, 128>}, {pipeline_mode = #tpu.pipeline_mode<synchronous>, transform_indices = @transform_1, window_bounds = array<i64: 128, 256>}, {pipeline_mode = #tpu.pipeline_mode<synchronous>, transform_indices = @transform_2, window_bounds = array<i64: 3, 256>}, {transform_indices = @transform_3, window_bounds = array<i64: 16, 256>}]} {
    %c0 = arith.constant 0 : index
    %c0_0 = arith.constant 0 : index
    %0 = vector.load %arg1[%c0, %c0_0] : memref<16x128xf32, #tpu.memory_space<vmem>>, vector<16x128xf32>
    %c0_1 = arith.constant 0 : index
    %c0_2 = arith.constant 0 : index
    %1 = vector.load %arg2[%c0_1, %c0_2] : memref<128x256xf32, #tpu.memory_space<vmem>>, vector<128x256xf32>
    %cst = arith.constant dense<0.000000e+00> : vector<16x256xf32>
    %2 = tpu.matmul %0, %1, %cst {dimension_numbers = #tpu.dot_dimension_numbers<[1], [0], [0], [1], [0, 0, 1, 1], [], []>, precision = #tpu.contract_precision<fp32>} : vector<16x128xf32>, vector<128x256xf32>, vector<16x256xf32> -> vector<16x256xf32>
    %c0_3 = arith.constant 0 : index
    %c0_4 = arith.constant 0 : index
    %3 = vector.load %arg3[%c0_3, %c0_4] : memref<3x256xf32, #tpu.memory_space<vmem>>, vector<3x256xf32>
    %4 = vector.extract_strided_slice %3 {offsets = [0, 0], sizes = [1, 256], strides = [1, 1]} : vector<3x256xf32> to vector<1x256xf32>
    %5 = vector.broadcast %4 : vector<1x256xf32> to vector<16x256xf32>
    %6 = arith.addf %2, %5 : vector<16x256xf32>
    %cst_5 = arith.constant dense<0.000000e+00> : vector<16xf32>
    %7 = vector.multi_reduction <add>, %6, %cst_5 [1] : vector<16x256xf32> to vector<16xf32>
    %8 = vector.shape_cast %7 : vector<16xf32> to vector<16x1xf32>
    %cst_6 = arith.constant 3.906250e-03 : f32
    %9 = vector.broadcast %cst_6 : f32 to vector<16x1xf32>
    %10 = arith.mulf %8, %9 : vector<16x1xf32>
    %11 = vector.broadcast %10 : vector<16x1xf32> to vector<16x256xf32>
    %12 = arith.subf %6, %11 : vector<16x256xf32>
    %13 = arith.mulf %12, %12 : vector<16x256xf32>
    %cst_7 = arith.constant dense<0.000000e+00> : vector<16xf32>
    %14 = vector.multi_reduction <add>, %13, %cst_7 [1] : vector<16x256xf32> to vector<16xf32>
    %15 = vector.shape_cast %14 : vector<16xf32> to vector<16x1xf32>
    %cst_8 = arith.constant 3.906250e-03 : f32
    %16 = vector.broadcast %cst_8 : f32 to vector<16x1xf32>
    %17 = arith.mulf %15, %16 : vector<16x1xf32>
    %cst_9 = arith.constant 9.99999996E-13 : f32
    %18 = vector.broadcast %cst_9 : f32 to vector<16x1xf32>
    %19 = arith.addf %17, %18 : vector<16x1xf32>
    %20 = math.rsqrt %19 : vector<16x1xf32>
    %21 = vector.broadcast %20 : vector<16x1xf32> to vector<16x256xf32>
    %22 = arith.mulf %12, %21 : vector<16x256xf32>
    %23 = vector.extract_strided_slice %3 {offsets = [1, 0], sizes = [1, 256], strides = [1, 1]} : vector<3x256xf32> to vector<1x256xf32>
    %24 = vector.broadcast %23 : vector<1x256xf32> to vector<16x256xf32>
    %25 = arith.mulf %22, %24 : vector<16x256xf32>
    %26 = vector.extract_strided_slice %3 {offsets = [2, 0], sizes = [1, 256], strides = [1, 1]} : vector<3x256xf32> to vector<1x256xf32>
    %27 = vector.broadcast %26 : vector<1x256xf32> to vector<16x256xf32>
    %28 = arith.addf %25, %27 : vector<16x256xf32>
    %c0_10 = arith.constant 0 : index
    %c0_11 = arith.constant 0 : index
    %29 = vector.load %arg4[%c0_10, %c0_11] : memref<16x256xf32, #tpu.memory_space<vmem>>, vector<16x256xf32>
    tpu.vector_store %arg4[%c0_10, %c0_11], %28 {strides = array<i32>} : memref<16x256xf32, #tpu.memory_space<vmem>>, vector<16x256xf32>,
    return
  }
  func.func @transform_0(%arg0: i32) -> (i32, i32) {
    %c0_i32 = arith.constant 0 : i32
    %c0_i32_0 = arith.constant 0 : i32
    return %arg0, %c0_i32 : i32, i32
  }
  func.func @transform_1(%arg0: i32) -> (i32, i32) {
    %c0_i32 = arith.constant 0 : i32
    %c0_i32_0 = arith.constant 0 : i32
    %c0_i32_1 = arith.constant 0 : i32
    return %c0_i32, %c0_i32_0 : i32, i32
  }
  func.func @transform_2(%arg0: i32) -> (i32, i32) {
    %c0_i32 = arith.constant 0 : i32
    %c0_i32_0 = arith.constant 0 : i32
    %c0_i32_1 = arith.constant 0 : i32
    return %c0_i32, %c0_i32_0 : i32, i32
  }
  func.func @transform_3(%arg0: i32) -> (i32, i32) {
    %c0_i32 = arith.constant 0 : i32
    %c0_i32_0 = arith.constant 0 : i32
    return %arg0, %c0_i32 : i32, i32
  }
}

</mosaic_0001>

<llo_original>
// kernel: tpu_custom_call.1
$region0: #{tpu_custom_call.1}
  #allocation0 [shape = 'u32[]', space=smem, size = 0x4, offset = 0x4, fixed_abs, tag = 'smem constant byte address 0x4 - core index']
  #allocation1 [shape = 'u32[72,128]{1,0:T(1,128)}', space=vmem, size = 0x9000, scoped, tag = 'internal scratch']
  %s0 = inlined_call_operand.hbm [shape: f32[16,128], index: 0, kind: input, shape index: {}]
  %s1 = inlined_call_operand.hbm [shape: f32[128,256], index: 1, kind: input, shape index: {}]
  %s2 = inlined_call_operand.hbm [shape: f32[3,256], index: 2, kind: input, shape index: {}]
  %s3 = inlined_call_operand.hbm [shape: f32[16,256], index: 3, kind: output, shape index: {}]
  %s4 = sld [smem:[#allocation0]]
  $region34: #{tpu_custom_call.1} parent=0
    _
  %s6 = ssub.s32 1, %s4
  %s7 = scalar_select 0, %s6, %s4
  $region1: #{tpu_custom_call.1} parent=0
    #allocation2 [shape = 'u8[8192]{0}', space=vmem, size = 0x2000, scoped, tag = 'input window, operand 0, single buffered']
    #allocation3 [shape = 's32[1]{0}', space=sflag, size = 0x4, scoped, tag = 'scoped memory for tpu_custom_call.1']
    #allocation4 [shape = 's32[1]{0}', space=sflag, size = 0x4, scoped, tag = 'scoped memory for tpu_custom_call.1']
    #allocation5 [shape = 'u8[131072]{0}', space=vmem, size = 0x20000, scoped, tag = 'input window, operand 1, single buffered']
    #allocation6 [shape = 's32[1]{0}', space=sflag, size = 0x4, scoped, tag = 'scoped memory for tpu_custom_call.1']
    #allocation7 [shape = 'u8[4096]{0}', space=vmem, size = 0x1000, scoped, tag = 'input window, operand 2, single buffered']
    #allocation8 [shape = 'u8[16384]{0}', space=vmem, size = 0x4000, scoped, tag = 'output window, operand 0, single buffered']
    %8 = vsyncpa [#allocation3], 0
    %9 = vsyncpa [#allocation6], 0
    %10 = vsyncpa [#allocation4], 0
    // Predicated region
    $region2: #{tpu_custom_call.1} parent=1 // pred_check
      _
    $region3: #{tpu_custom_call.1} parent=1 // pred_check_branch
      %12 = sbr.rel (0) target = $region5
    $region4: #{tpu_custom_call.1} parent=1 // pred_region
      %14 = vsyncadd [#allocation3], 0
      %s15 = sshll.u32 %s0, 4
      %s16 = int_to_ptr.hbm [resolvable:$true] %s15
      %s17 = sshll.u32 [#allocation2], 4
      %s18 = int_to_ptr.vmem [resolvable:$true] %s17
      %23 = dma.hbm_to_vmem [thread:$0]  %s16, 256, %s18, [#allocation3], 128, 128, 8
    $region5: #{tpu_custom_call.1} parent=1 // pred_fallthru
      _
    // Predicated region
    $region6: #{tpu_custom_call.1} parent=1 // pred_check
      _
    $region7: #{tpu_custom_call.1} parent=1 // pred_check_branch
      %25 = sbr.rel (0) target = $region9
    $region8: #{tpu_custom_call.1} parent=1 // pred_region
      %27 = vsyncadd [#allocation6], 0
      %s28 = sshll.u32 %s1, 4
      %s29 = int_to_ptr.hbm [resolvable:$true] %s28
      %s30 = sshll.u32 [#allocation5], 4
      %s31 = int_to_ptr.vmem [resolvable:$true] %s30
      %36 = dma.hbm_to_vmem [thread:$0]  %s29, 4096, %s31, [#allocation6], 256, 256, 16
    $region9: #{tpu_custom_call.1} parent=1 // pred_fallthru
      _
    // Predicated region
    $region10: #{tpu_custom_call.1} parent=1 // pred_check
      _
    $region11: #{tpu_custom_call.1} parent=1 // pred_check_branch
      %38 = sbr.rel (0) target = $region13
    $region12: #{tpu_custom_call.1} parent=1 // pred_region
      %40 = vsyncadd [#allocation6], 0
      %s42 = sshll.u32 %s2, 4
      %s43 = int_to_ptr.hbm [resolvable:$true] %s42
      %s44 = sshll.u32 [#allocation7], 4
      %s45 = int_to_ptr.vmem [resolvable:$true] %s44
      %47 = dma.hbm_to_vmem [thread:$0]  %s43, 128, %s45, [#allocation6]
    $region13: #{tpu_custom_call.1} parent=1 // pred_fallthru
      _
    // Predicated region
    $region14: #{tpu_custom_call.1} parent=1 // pred_check
      _
    $region15: #{tpu_custom_call.1} parent=1 // pred_check_branch
      %49 = sbr.rel (0) target = $region17
    $region16: #{tpu_custom_call.1} parent=1 // pred_region
      %51 = dma.done [#allocation3], 256
    $region17: #{tpu_custom_call.1} parent=1 // pred_fallthru
      _
    // Predicated region
    $region18: #{tpu_custom_call.1} parent=1 // pred_check
      _
    $region19: #{tpu_custom_call.1} parent=1 // pred_check_branch
      %53 = sbr.rel (0) target = $region21
    $region20: #{tpu_custom_call.1} parent=1 // pred_region
      %55 = dma.done [#allocation6], 4096
    $region21: #{tpu_custom_call.1} parent=1 // pred_fallthru
      _
    // Predicated region
    $region22: #{tpu_custom_call.1} parent=1 // pred_check
      _
    $region23: #{tpu_custom_call.1} parent=1 // pred_check_branch
      %57 = sbr.rel (0) target = $region25
    $region24: #{tpu_custom_call.1} parent=1 // pred_region
      %59 = dma.done [#allocation6], 128
    $region25: #{tpu_custom_call.1} parent=1 // pred_fallthru
      _
    %v60 = vld [vmem:[#allocation2] sm:$0xff]
    %v61 = vld [vmem:[#allocation2 + $0x8] sm:$0xff]
    %v62 = vld [vmem:[#allocation5] sm:$0xff]
    %v63 = vld [vmem:[#allocation5 + $0x8] sm:$0xff]
    %v64 = vld [vmem:[#allocation5 + $0x10] sm:$0xff]
    %v65 = vld [vmem:[#allocation5 + $0x18] sm:$0xff]
    %v66 = vld [vmem:[#allocation5 + $0x20] sm:$0xff]
    %v67 = vld [vmem:[#allocation5 + $0x28] sm:$0xff]
    %v68 = vld [vmem:[#allocation5 + $0x30] sm:$0xff]
    %v69 = vld [vmem:[#allocation5 + $0x38] sm:$0xff]
    %v70 = vld [vmem:[#allocation5 + $0x40] sm:$0xff]
    %v71 = vld [vmem:[#allocation5 + $0x48] sm:$0xff]
    %v72 = vld [vmem:[#allocation5 + $0x50] sm:$0xff]
    %v73 = vld [vmem:[#allocation5 + $0x58] sm:$0xff]
    %v74 = vld [vmem:[#allocation5 + $0x60] sm:$0xff]
    %v75 = vld [vmem:[#allocation5 + $0x68] sm:$0xff]
    %v76 = vld [vmem:[#allocation5 + $0x70] sm:$0xff]
    %v77 = vld [vmem:[#allocation5 + $0x78] sm:$0xff]
    %v78 = vld [vmem:[#allocation5 + $0x80] sm:$0xff]
    %v79 = vld [vmem:[#allocation5 + $0x88] sm:$0xff]
    %v80 = vld [vmem:[#allocation5 + $0x90] sm:$0xff]
    %v81 = vld [vmem:[#allocation5 + $0x98] sm:$0xff]
    %v82 = vld [vmem:[#allocation5 + $0xa0] sm:$0xff]
    %v83 = vld [vmem:[#allocation5 + $0xa8] sm:$0xff]
    %v84 = vld [vmem:[#allocation5 + $0xb0] sm:$0xff]
    %v85 = vld [vmem:[#allocation5 + $0xb8] sm:$0xff]
    %v86 = vld [vmem:[#allocation5 + $0xc0] sm:$0xff]
    %v87 = vld [vmem:[#allocation5 + $0xc8] sm:$0xff]
    %v88 = vld [vmem:[#allocation5 + $0xd0] sm:$0xff]
    %v89 = vld [vmem:[#allocation5 + $0xd8] sm:$0xff]
    %v90 = vld [vmem:[#allocation5 + $0xe0] sm:$0xff]
    %v91 = vld [vmem:[#allocation5 + $0xe8] sm:$0xff]
    %v92 = vld [vmem:[#allocation5 + $0xf0] sm:$0xff]
    %v93 = vld [vmem:[#allocation5 + $0xf8] sm:$0xff]
    %v94 = vld [vmem:[#allocation7] sm:$0x77]
    %v96 = vperm.slane %v94, 0
    %v97 = vperm.slane %v94, 4
    %v100 = vperm.slane %v96, 0
    %v101 = vperm.slane %v97, 0
    %v102 = vand.u32 %v92, 4294901760
    %103 = vmatpush.msra.mxu0 %v102
    %v104 = vand.u32 %v90, 4294901760
    %105 = vmatpush.msra.mxu0 %v104
    %v106 = vand.u32 %v88, 4294901760
    %107 = vmatpush.msra.mxu0 %v106
    %v108 = vand.u32 %v86, 4294901760
    %109 = vmatpush.msra.mxu0 %v108
    %v110 = vand.u32 %v84, 4294901760
    %111 = vmatpush.msra.mxu0 %v110
    %v112 = vand.u32 %v82, 4294901760
    %113 = vmatpush.msra.mxu0 %v112
    %v114 = vand.u32 %v80, 4294901760
    %115 = vmatpush.msra.mxu0 %v114
    %v116 = vand.u32 %v78, 4294901760
    %117 = vmatpush.msra.mxu0 %v116
    %v118 = vand.u32 %v76, 4294901760
    %119 = vmatpush.msra.mxu0 %v118
    %v120 = vand.u32 %v74, 4294901760
    %121 = vmatpush.msra.mxu0 %v120
    %v122 = vand.u32 %v72, 4294901760
    %123 = vmatpush.msra.mxu0 %v122
    %v124 = vand.u32 %v70, 4294901760
    %125 = vmatpush.msra.mxu0 %v124
    %v126 = vand.u32 %v68, 4294901760
    %127 = vmatpush.msra.mxu0 %v126
    %v128 = vand.u32 %v66, 4294901760
    %129 = vmatpush.msra.mxu0 %v128
    %v130 = vand.u32 %v64, 4294901760
    %131 = vmatpush.msra.mxu0 %v130
    %v132 = vand.u32 %v62, 4294901760
    %133 = vmatpush.msra.mxu0 %v132
    %v134 = vand.u32 %v60, 4294901760
    %v135 = vsub.f32 %v60, %v134
    %v136 = vand.u32 %v135, 4294901760
    %v137 = vsub.f32 %v135, %v136
    %v138 = vand.u32 %v137, 4294901760
    %139 = vmatmul.f32.gmra.mxu0 %v138
    %v140 = vpop.f32.mrf.mxu0
    %v141 = vadd.f32 %v100, %v140
    %v142 = vand.u32 %v61, 4294901760
    %v143 = vsub.f32 %v61, %v142
    %v144 = vand.u32 %v143, 4294901760
    %v145 = vsub.f32 %v143, %v144
    %v146 = vand.u32 %v145, 4294901760
    %147 = vmatmul.f32.gmra.mxu0 %v146
    %v148 = vpop.f32.mrf.mxu0
    %v149 = vadd.f32 %v100, %v148
    %150 = vdwg.mxu0
    %v151 = vand.u32 %v92, 4294901760
    %v152 = vsub.f32 %v92, %v151
    %v153 = vand.u32 %v152, 4294901760
    %v154 = vsub.f32 %v152, %v153
    %v155 = vand.u32 %v154, 4294901760
    %156 = vmatpush.msra.mxu0 %v155
    %v157 = vand.u32 %v90, 4294901760
    %v158 = vsub.f32 %v90, %v157
    %v159 = vand.u32 %v158, 4294901760
    %v160 = vsub.f32 %v158, %v159
    %v161 = vand.u32 %v160, 4294901760
    %162 = vmatpush.msra.mxu0 %v161
    %v163 = vand.u32 %v88, 4294901760
    %v164 = vsub.f32 %v88, %v163
    %v165 = vand.u32 %v164, 4294901760
    %v166 = vsub.f32 %v164, %v165
    %v167 = vand.u32 %v166, 4294901760
    %168 = vmatpush.msra.mxu0 %v167
    %v169 = vand.u32 %v86, 4294901760
    %v170 = vsub.f32 %v86, %v169
    %v171 = vand.u32 %v170, 4294901760
    %v172 = vsub.f32 %v170, %v171
    %v173 = vand.u32 %v172, 4294901760
    %174 = vmatpush.msra.mxu0 %v173
    %v175 = vand.u32 %v84, 4294901760
    %v176 = vsub.f32 %v84, %v175
    %v177 = vand.u32 %v176, 4294901760
    %v178 = vsub.f32 %v176, %v177
    %v179 = vand.u32 %v178, 4294901760
    %180 = vmatpush.msra.mxu0 %v179
    %v181 = vand.u32 %v82, 4294901760
    %v182 = vsub.f32 %v82, %v181
    %v183 = vand.u32 %v182, 4294901760
    %v184 = vsub.f32 %v182, %v183
    %v185 = vand.u32 %v184, 4294901760
    %186 = vmatpush.msra.mxu0 %v185
    %v187 = vand.u32 %v80, 4294901760
    %v188 = vsub.f32 %v80, %v187
    %v189 = vand.u32 %v188, 4294901760
    %v190 = vsub.f32 %v188, %v189
    %v191 = vand.u32 %v190, 4294901760
    %192 = vmatpush.msra.mxu0 %v191
    %v193 = vand.u32 %v78, 4294901760
    %v194 = vsub.f32 %v78, %v193
    %v195 = vand.u32 %v194, 4294901760
    %v196 = vsub.f32 %v194, %v195
    %v197 = vand.u32 %v196, 4294901760
    %198 = vmatpush.msra.mxu0 %v197
    %v199 = vand.u32 %v76, 4294901760
    %v200 = vsub.f32 %v76, %v199
    %v201 = vand.u32 %v200, 4294901760
    %v202 = vsub.f32 %v200, %v201
    %v203 = vand.u32 %v202, 4294901760
    %204 = vmatpush.msra.mxu0 %v203
    %v205 = vand.u32 %v74, 4294901760
    %v206 = vsub.f32 %v74, %v205
    %v207 = vand.u32 %v206, 4294901760
    %v208 = vsub.f32 %v206, %v207
    %v209 = vand.u32 %v208, 4294901760
    %210 = vmatpush.msra.mxu0 %v209
    %v211 = vand.u32 %v72, 4294901760
    %v212 = vsub.f32 %v72, %v211
    %v213 = vand.u32 %v212, 4294901760
    %v214 = vsub.f32 %v212, %v213
    %v215 = vand.u32 %v214, 4294901760
    %216 = vmatpush.msra.mxu0 %v215
    %v217 = vand.u32 %v70, 4294901760
    %v218 = vsub.f32 %v70, %v217
    %v219 = vand.u32 %v218, 4294901760
    %v220 = vsub.f32 %v218, %v219
    %v221 = vand.u32 %v220, 4294901760
    %222 = vmatpush.msra.mxu0 %v221
    %v223 = vand.u32 %v68, 4294901760
    %v224 = vsub.f32 %v68, %v223
    %v225 = vand.u32 %v224, 4294901760
    %v226 = vsub.f32 %v224, %v225
    %v227 = vand.u32 %v226, 4294901760
    %228 = vmatpush.msra.mxu0 %v227
    %v229 = vand.u32 %v66, 4294901760
    %v230 = vsub.f32 %v66, %v229
    %v231 = vand.u32 %v230, 4294901760
    %v232 = vsub.f32 %v230, %v231
    %v233 = vand.u32 %v232, 4294901760
    %234 = vmatpush.msra.mxu0 %v233
    %v235 = vand.u32 %v64, 4294901760
    %v236 = vsub.f32 %v64, %v235
    %v237 = vand.u32 %v236, 4294901760
    %v238 = vsub.f32 %v236, %v237
    %v239 = vand.u32 %v238, 4294901760
    %240 = vmatpush.msra.mxu0 %v239
    %v241 = vand.u32 %v62, 4294901760
    %v242 = vsub.f32 %v62, %v241
    %v243 = vand.u32 %v242, 4294901760
    %v244 = vsub.f32 %v242, %v243
    %v245 = vand.u32 %v244, 4294901760
    %246 = vmatpush.msra.mxu0 %v245
    %v247 = vand.u32 %v60, 4294901760
    %248 = vmatmul.f32.gmra.mxu0 %v247
    %v249 = vpop.f32.mrf.mxu0
    %v250 = vadd.f32 %v141, %v249
    %v251 = vand.u32 %v61, 4294901760
    %252 = vmatmul.f32.gmra.mxu0 %v251
    %v253 = vpop.f32.mrf.mxu0
    %v254 = vadd.f32 %v149, %v253
    %255 = vdwg.mxu0
    %v256 = vand.u32 %v92, 4294901760
    %v257 = vsub.f32 %v92, %v256
    %258 = vmatpush.msra.mxu0 %v257
    %v259 = vand.u32 %v90, 4294901760
    %v260 = vsub.f32 %v90, %v259
    %261 = vmatpush.msra.mxu0 %v260
    %v262 = vand.u32 %v88, 4294901760
    %v263 = vsub.f32 %v88, %v262
    %264 = vmatpush.msra.mxu0 %v263
    %v265 = vand.u32 %v86, 4294901760
    %v266 = vsub.f32 %v86, %v265
    %267 = vmatpush.msra.mxu0 %v266
    %v268 = vand.u32 %v84, 4294901760
    %v269 = vsub.f32 %v84, %v268
    %270 = vmatpush.msra.mxu0 %v269
    %v271 = vand.u32 %v82, 4294901760
    %v272 = vsub.f32 %v82, %v271
    %273 = vmatpush.msra.mxu0 %v272
    %v274 = vand.u32 %v80, 4294901760
    %v275 = vsub.f32 %v80, %v274
    %276 = vmatpush.msra.mxu0 %v275
    %v277 = vand.u32 %v78, 4294901760
    %v278 = vsub.f32 %v78, %v277
    %279 = vmatpush.msra.mxu0 %v278
    %v280 = vand.u32 %v76, 4294901760
    %v281 = vsub.f32 %v76, %v280
    %282 = vmatpush.msra.mxu0 %v281
    %v283 = vand.u32 %v74, 4294901760
    %v284 = vsub.f32 %v74, %v283
    %285 = vmatpush.msra.mxu0 %v284
    %v286 = vand.u32 %v72, 4294901760
    %v287 = vsub.f32 %v72, %v286
    %288 = vmatpush.msra.mxu0 %v287
    %v289 = vand.u32 %v70, 4294901760
    %v290 = vsub.f32 %v70, %v289
    %291 = vmatpush.msra.mxu0 %v290
    %v292 = vand.u32 %v68, 4294901760
    %v293 = vsub.f32 %v68, %v292
    %294 = vmatpush.msra.mxu0 %v293
    %v295 = vand.u32 %v66, 4294901760
    %v296 = vsub.f32 %v66, %v295
    %297 = vmatpush.msra.mxu0 %v296
    %v298 = vand.u32 %v64, 4294901760
    %v299 = vsub.f32 %v64, %v298
    %300 = vmatpush.msra.mxu0 %v299
    %v301 = vand.u32 %v62, 4294901760
    %v302 = vsub.f32 %v62, %v301
    %303 = vmatpush.msra.mxu0 %v302
    %v304 = vand.u32 %v60, 4294901760
    %v305 = vsub.f32 %v60, %v304
    %306 = vmatmul.f32.gmra.mxu0 %v305
    %v307 = vpop.f32.mrf.mxu0
    %v308 = vadd.f32 %v250, %v307
    %v309 = vand.u32 %v61, 4294901760
    %v310 = vsub.f32 %v61, %v309
    %311 = vmatmul.f32.gmra.mxu0 %v310
    %v312 = vpop.f32.mrf.mxu0
    %v313 = vadd.f32 %v254, %v312
    %314 = vdwg.mxu0
    %v315 = vand.u32 %v92, 4294901760
    %316 = vmatpush.msra.mxu0 %v315
    %v317 = vand.u32 %v90, 4294901760
    %318 = vmatpush.msra.mxu0 %v317
    %v319 = vand.u32 %v88, 4294901760
    %320 = vmatpush.msra.mxu0 %v319
    %v321 = vand.u32 %v86, 4294901760
    %322 = vmatpush.msra.mxu0 %v321
    %v323 = vand.u32 %v84, 4294901760
    %324 = vmatpush.msra.mxu0 %v323
    %v325 = vand.u32 %v82, 4294901760
    %326 = vmatpush.msra.mxu0 %v325
    %v327 = vand.u32 %v80, 4294901760
    %328 = vmatpush.msra.mxu0 %v327
    %v329 = vand.u32 %v78, 4294901760
    %330 = vmatpush.msra.mxu0 %v329
    %v331 = vand.u32 %v76, 4294901760
    %332 = vmatpush.msra.mxu0 %v331
    %v333 = vand.u32 %v74, 4294901760
    %334 = vmatpush.msra.mxu0 %v333
    %v335 = vand.u32 %v72, 4294901760
    %336 = vmatpush.msra.mxu0 %v335
    %v337 = vand.u32 %v70, 4294901760
    %338 = vmatpush.msra.mxu0 %v337
    %v339 = vand.u32 %v68, 4294901760
    %340 = vmatpush.msra.mxu0 %v339
    %v341 = vand.u32 %v66, 4294901760
    %342 = vmatpush.msra.mxu0 %v341
    %v343 = vand.u32 %v64, 4294901760
    %344 = vmatpush.msra.mxu0 %v343
    %v345 = vand.u32 %v62, 4294901760
    %346 = vmatpush.msra.mxu0 %v345
    %v347 = vand.u32 %v60, 4294901760
    %v348 = vsub.f32 %v60, %v347
    %v349 = vand.u32 %v348, 4294901760
    %350 = vmatmul.f32.gmra.mxu0 %v349
    %v351 = vpop.f32.mrf.mxu0
    %v352 = vadd.f32 %v308, %v351
    %v353 = vand.u32 %v61, 4294901760
    %v354 = vsub.f32 %v61, %v353
    %v355 = vand.u32 %v354, 4294901760
    %356 = vmatmul.f32.gmra.mxu0 %v355
    %v357 = vpop.f32.mrf.mxu0
    %v358 = vadd.f32 %v313, %v357
    %359 = vdwg.mxu0
    %v360 = vand.u32 %v92, 4294901760
    %v361 = vsub.f32 %v92, %v360
    %v362 = vand.u32 %v361, 4294901760
    %363 = vmatpush.msra.mxu0 %v362
    %v364 = vand.u32 %v90, 4294901760
    %v365 = vsub.f32 %v90, %v364
    %v366 = vand.u32 %v365, 4294901760
    %367 = vmatpush.msra.mxu0 %v366
    %v368 = vand.u32 %v88, 4294901760
    %v369 = vsub.f32 %v88, %v368
    %v370 = vand.u32 %v369, 4294901760
    %371 = vmatpush.msra.mxu0 %v370
    %v372 = vand.u32 %v86, 4294901760
    %v373 = vsub.f32 %v86, %v372
    %v374 = vand.u32 %v373, 4294901760
    %375 = vmatpush.msra.mxu0 %v374
    %v376 = vand.u32 %v84, 4294901760
    %v377 = vsub.f32 %v84, %v376
    %v378 = vand.u32 %v377, 4294901760
    %379 = vmatpush.msra.mxu0 %v378
    %v380 = vand.u32 %v82, 4294901760
    %v381 = vsub.f32 %v82, %v380
    %v382 = vand.u32 %v381, 4294901760
    %383 = vmatpush.msra.mxu0 %v382
    %v384 = vand.u32 %v80, 4294901760
    %v385 = vsub.f32 %v80, %v384
    %v386 = vand.u32 %v385, 4294901760
    %387 = vmatpush.msra.mxu0 %v386
    %v388 = vand.u32 %v78, 4294901760
    %v389 = vsub.f32 %v78, %v388
    %v390 = vand.u32 %v389, 4294901760
    %391 = vmatpush.msra.mxu0 %v390
    %v392 = vand.u32 %v76, 4294901760
    %v393 = vsub.f32 %v76, %v392
    %v394 = vand.u32 %v393, 4294901760
    %395 = vmatpush.msra.mxu0 %v394
    %v396 = vand.u32 %v74, 4294901760
    %v397 = vsub.f32 %v74, %v396
    %v398 = vand.u32 %v397, 4294901760
    %399 = vmatpush.msra.mxu0 %v398
    %v400 = vand.u32 %v72, 4294901760
    %v401 = vsub.f32 %v72, %v400
    %v402 = vand.u32 %v401, 4294901760
    %403 = vmatpush.msra.mxu0 %v402
    %v404 = vand.u32 %v70, 4294901760
    %v405 = vsub.f32 %v70, %v404
    %v406 = vand.u32 %v405, 4294901760
    %407 = vmatpush.msra.mxu0 %v406
    %v408 = vand.u32 %v68, 4294901760
    %v409 = vsub.f32 %v68, %v408
    %v410 = vand.u32 %v409, 4294901760
    %411 = vmatpush.msra.mxu0 %v410
    %v412 = vand.u32 %v66, 4294901760
    %v413 = vsub.f32 %v66, %v412
    %v414 = vand.u32 %v413, 4294901760
    %415 = vmatpush.msra.mxu0 %v414
    %v416 = vand.u32 %v64, 4294901760
    %v417 = vsub.f32 %v64, %v416
    %v418 = vand.u32 %v417, 4294901760
    %419 = vmatpush.msra.mxu0 %v418
    %v420 = vand.u32 %v62, 4294901760
    %v421 = vsub.f32 %v62, %v420
    %v422 = vand.u32 %v421, 4294901760
    %423 = vmatpush.msra.mxu0 %v422
    %v424 = vand.u32 %v60, 4294901760
    %425 = vmatmul.f32.gmra.mxu0 %v424
    %v426 = vpop.f32.mrf.mxu0
    %v427 = vadd.f32 %v352, %v426
    %v428 = vand.u32 %v61, 4294901760
    %429 = vmatmul.f32.gmra.mxu0 %v428
    %v430 = vpop.f32.mrf.mxu0
    %v431 = vadd.f32 %v358, %v430
    %432 = vdwg.mxu0
    %v433 = vand.u32 %v92, 4294901760
    %434 = vmatpush.msra.mxu0 %v433
    %v435 = vand.u32 %v90, 4294901760
    %436 = vmatpush.msra.mxu0 %v435
    %v437 = vand.u32 %v88, 4294901760
    %438 = vmatpush.msra.mxu0 %v437
    %v439 = vand.u32 %v86, 4294901760
    %440 = vmatpush.msra.mxu0 %v439
    %v441 = vand.u32 %v84, 4294901760
    %442 = vmatpush.msra.mxu0 %v441
    %v443 = vand.u32 %v82, 4294901760
    %444 = vmatpush.msra.mxu0 %v443
    %v445 = vand.u32 %v80, 4294901760
    %446 = vmatpush.msra.mxu0 %v445
    %v447 = vand.u32 %v78, 4294901760
    %448 = vmatpush.msra.mxu0 %v447
    %v449 = vand.u32 %v76, 4294901760
    %450 = vmatpush.msra.mxu0 %v449
    %v451 = vand.u32 %v74, 4294901760
    %452 = vmatpush.msra.mxu0 %v451
    %v453 = vand.u32 %v72, 4294901760
    %454 = vmatpush.msra.mxu0 %v453
    %v455 = vand.u32 %v70, 4294901760
    %456 = vmatpush.msra.mxu0 %v455
    %v457 = vand.u32 %v68, 4294901760
    %458 = vmatpush.msra.mxu0 %v457
    %v459 = vand.u32 %v66, 4294901760
    %460 = vmatpush.msra.mxu0 %v459
    %v461 = vand.u32 %v64, 4294901760
    %462 = vmatpush.msra.mxu0 %v461
    %v463 = vand.u32 %v62, 4294901760
    %464 = vmatpush.msra.mxu0 %v463
    %v465 = vand.u32 %v60, 4294901760
    %466 = vmatmul.f32.gmra.mxu0 %v465
    %v467 = vpop.f32.mrf.mxu0
    %v468 = vadd.f32 %v427, %v467
    %v469 = vand.u32 %v61, 4294901760
    %470 = vmatmul.f32.gmra.mxu0 %v469
    %v471 = vpop.f32.mrf.mxu0
    %v472 = vadd.f32 %v431, %v471
    %473 = vdwg.mxu0
    %v474 = vand.u32 %v93, 4294901760
    %475 = vmatpush.msra.mxu0 %v474
    %v476 = vand.u32 %v91, 4294901760
    %477 = vmatpush.msra.mxu0 %v476
    %v478 = vand.u32 %v89, 4294901760
    %479 = vmatpush.msra.mxu0 %v478
    %v480 = vand.u32 %v87, 4294901760
    %481 = vmatpush.msra.mxu0 %v480
    %v482 = vand.u32 %v85, 4294901760
    %483 = vmatpush.msra.mxu0 %v482
    %v484 = vand.u32 %v83, 4294901760
    %485 = vmatpush.msra.mxu0 %v484
    %v486 = vand.u32 %v81, 4294901760
    %487 = vmatpush.msra.mxu0 %v486
    %v488 = vand.u32 %v79, 4294901760
    %489 = vmatpush.msra.mxu0 %v488
    %v490 = vand.u32 %v77, 4294901760
    %491 = vmatpush.msra.mxu0 %v490
    %v492 = vand.u32 %v75, 4294901760
    %493 = vmatpush.msra.mxu0 %v492
    %v494 = vand.u32 %v73, 4294901760
    %495 = vmatpush.msra.mxu0 %v494
    %v496 = vand.u32 %v71, 4294901760
    %497 = vmatpush.msra.mxu0 %v496
    %v498 = vand.u32 %v69, 4294901760
    %499 = vmatpush.msra.mxu0 %v498
    %v500 = vand.u32 %v67, 4294901760
    %501 = vmatpush.msra.mxu0 %v500
    %v502 = vand.u32 %v65, 4294901760
    %503 = vmatpush.msra.mxu0 %v502
    %v504 = vand.u32 %v63, 4294901760
    %505 = vmatpush.msra.mxu0 %v504
    %v506 = vand.u32 %v60, 4294901760
    %v507 = vsub.f32 %v60, %v506
    %v508 = vand.u32 %v507, 4294901760
    %v509 = vsub.f32 %v507, %v508
    %v510 = vand.u32 %v509, 4294901760
    %511 = vmatmul.f32.gmra.mxu0 %v510
    %v512 = vpop.f32.mrf.mxu0
    %v513 = vadd.f32 %v101, %v512
    %v514 = vand.u32 %v61, 4294901760
    %v515 = vsub.f32 %v61, %v514
    %v516 = vand.u32 %v515, 4294901760
    %v517 = vsub.f32 %v515, %v516
    %v518 = vand.u32 %v517, 4294901760
    %519 = vmatmul.f32.gmra.mxu0 %v518
    %v520 = vpop.f32.mrf.mxu0
    %v521 = vadd.f32 %v101, %v520
    %522 = vdwg.mxu0
    %v523 = vand.u32 %v93, 4294901760
    %v524 = vsub.f32 %v93, %v523
    %v525 = vand.u32 %v524, 4294901760
    %v526 = vsub.f32 %v524, %v525
    %v527 = vand.u32 %v526, 4294901760
    %528 = vmatpush.msra.mxu0 %v527
    %v529 = vand.u32 %v91, 4294901760
    %v530 = vsub.f32 %v91, %v529
    %v531 = vand.u32 %v530, 4294901760
    %v532 = vsub.f32 %v530, %v531
    %v533 = vand.u32 %v532, 4294901760
    %534 = vmatpush.msra.mxu0 %v533
    %v535 = vand.u32 %v89, 4294901760
    %v536 = vsub.f32 %v89, %v535
    %v537 = vand.u32 %v536, 4294901760
    %v538 = vsub.f32 %v536, %v537
    %v539 = vand.u32 %v538, 4294901760
    %540 = vmatpush.msra.mxu0 %v539
    %v541 = vand.u32 %v87, 4294901760
    %v542 = vsub.f32 %v87, %v541
    %v543 = vand.u32 %v542, 4294901760
    %v544 = vsub.f32 %v542, %v543
    %v545 = vand.u32 %v544, 4294901760
    %546 = vmatpush.msra.mxu0 %v545
    %v547 = vand.u32 %v85, 4294901760
    %v548 = vsub.f32 %v85, %v547
    %v549 = vand.u32 %v548, 4294901760
    %v550 = vsub.f32 %v548, %v549
    %v551 = vand.u32 %v550, 4294901760
    %552 = vmatpush.msra.mxu0 %v551
    %v553 = vand.u32 %v83, 4294901760
    %v554 = vsub.f32 %v83, %v553
    %v555 = vand.u32 %v554, 4294901760
    %v556 = vsub.f32 %v554, %v555
    %v557 = vand.u32 %v556, 4294901760
    %558 = vmatpush.msra.mxu0 %v557
    %v559 = vand.u32 %v81, 4294901760
    %v560 = vsub.f32 %v81, %v559
    %v561 = vand.u32 %v560, 4294901760
    %v562 = vsub.f32 %v560, %v561
    %v563 = vand.u32 %v562, 4294901760
    %564 = vmatpush.msra.mxu0 %v563
    %v565 = vand.u32 %v79, 4294901760
    %v566 = vsub.f32 %v79, %v565
    %v567 = vand.u32 %v566, 4294901760
    %v568 = vsub.f32 %v566, %v567
    %v569 = vand.u32 %v568, 4294901760
    %570 = vmatpush.msra.mxu0 %v569
    %v571 = vand.u32 %v77, 4294901760
    %v572 = vsub.f32 %v77, %v571
    %v573 = vand.u32 %v572, 4294901760
    %v574 = vsub.f32 %v572, %v573
    %v575 = vand.u32 %v574, 4294901760
    %576 = vmatpush.msra.mxu0 %v575
    %v577 = vand.u32 %v75, 4294901760
    %v578 = vsub.f32 %v75, %v577
    %v579 = vand.u32 %v578, 4294901760
    %v580 = vsub.f32 %v578, %v579
    %v581 = vand.u32 %v580, 4294901760
    %582 = vmatpush.msra.mxu0 %v581
    %v583 = vand.u32 %v73, 4294901760
    %v584 = vsub.f32 %v73, %v583
    %v585 = vand.u32 %v584, 4294901760
    %v586 = vsub.f32 %v584, %v585
    %v587 = vand.u32 %v586, 4294901760
    %588 = vmatpush.msra.mxu0 %v587
    %v589 = vand.u32 %v71, 4294901760
    %v590 = vsub.f32 %v71, %v589
    %v591 = vand.u32 %v590, 4294901760
    %v592 = vsub.f32 %v590, %v591
    %v593 = vand.u32 %v592, 4294901760
    %594 = vmatpush.msra.mxu0 %v593
    %v595 = vand.u32 %v69, 4294901760
    %v596 = vsub.f32 %v69, %v595
    %v597 = vand.u32 %v596, 4294901760
    %v598 = vsub.f32 %v596, %v597
    %v599 = vand.u32 %v598, 4294901760
    %600 = vmatpush.msra.mxu0 %v599
    %v601 = vand.u32 %v67, 4294901760
    %v602 = vsub.f32 %v67, %v601
    %v603 = vand.u32 %v602, 4294901760
    %v604 = vsub.f32 %v602, %v603
    %v605 = vand.u32 %v604, 4294901760
    %606 = vmatpush.msra.mxu0 %v605
    %v607 = vand.u32 %v65, 4294901760
    %v608 = vsub.f32 %v65, %v607
    %v609 = vand.u32 %v608, 4294901760
    %v610 = vsub.f32 %v608, %v609
    %v611 = vand.u32 %v610, 4294901760
    %612 = vmatpush.msra.mxu0 %v611
    %v613 = vand.u32 %v63, 4294901760
    %v614 = vsub.f32 %v63, %v613
    %v615 = vand.u32 %v614, 4294901760
    %v616 = vsub.f32 %v614, %v615
    %v617 = vand.u32 %v616, 4294901760
    %618 = vmatpush.msra.mxu0 %v617
    %v619 = vand.u32 %v60, 4294901760
    %620 = vmatmul.f32.gmra.mxu0 %v619
    %v621 = vpop.f32.mrf.mxu0
    %v622 = vadd.f32 %v513, %v621
    %v623 = vand.u32 %v61, 4294901760
    %624 = vmatmul.f32.gmra.mxu0 %v623
    %v625 = vpop.f32.mrf.mxu0
    %v626 = vadd.f32 %v521, %v625
    %627 = vdwg.mxu0
    %v628 = vand.u32 %v93, 4294901760
    %v629 = vsub.f32 %v93, %v628
    %630 = vmatpush.msra.mxu0 %v629
    %v631 = vand.u32 %v91, 4294901760
    %v632 = vsub.f32 %v91, %v631
    %633 = vmatpush.msra.mxu0 %v632
    %v634 = vand.u32 %v89, 4294901760
    %v635 = vsub.f32 %v89, %v634
    %636 = vmatpush.msra.mxu0 %v635
    %v637 = vand.u32 %v87, 4294901760
    %v638 = vsub.f32 %v87, %v637
    %639 = vmatpush.msra.mxu0 %v638
    %v640 = vand.u32 %v85, 4294901760
    %v641 = vsub.f32 %v85, %v640
    %642 = vmatpush.msra.mxu0 %v641
    %v643 = vand.u32 %v83, 4294901760
    %v644 = vsub.f32 %v83, %v643
    %645 = vmatpush.msra.mxu0 %v644
    %v646 = vand.u32 %v81, 4294901760
    %v647 = vsub.f32 %v81, %v646
    %648 = vmatpush.msra.mxu0 %v647
    %v649 = vand.u32 %v79, 4294901760
    %v650 = vsub.f32 %v79, %v649
    %651 = vmatpush.msra.mxu0 %v650
    %v652 = vand.u32 %v77, 4294901760
    %v653 = vsub.f32 %v77, %v652
    %654 = vmatpush.msra.mxu0 %v653
    %v655 = vand.u32 %v75, 4294901760
    %v656 = vsub.f32 %v75, %v655
    %657 = vmatpush.msra.mxu0 %v656
    %v658 = vand.u32 %v73, 4294901760
    %v659 = vsub.f32 %v73, %v658
    %660 = vmatpush.msra.mxu0 %v659
    %v661 = vand.u32 %v71, 4294901760
    %v662 = vsub.f32 %v71, %v661
    %663 = vmatpush.msra.mxu0 %v662
    %v664 = vand.u32 %v69, 4294901760
    %v665 = vsub.f32 %v69, %v664
    %666 = vmatpush.msra.mxu0 %v665
    %v667 = vand.u32 %v67, 4294901760
    %v668 = vsub.f32 %v67, %v667
    %669 = vmatpush.msra.mxu0 %v668
    %v670 = vand.u32 %v65, 4294901760
    %v671 = vsub.f32 %v65, %v670
    %672 = vmatpush.msra.mxu0 %v671
    %v673 = vand.u32 %v63, 4294901760
    %v674 = vsub.f32 %v63, %v673
    %675 = vmatpush.msra.mxu0 %v674
    %v676 = vand.u32 %v60, 4294901760
    %v677 = vsub.f32 %v60, %v676
    %678 = vmatmul.f32.gmra.mxu0 %v677
    %v679 = vpop.f32.mrf.mxu0
    %v680 = vadd.f32 %v622, %v679
    %v681 = vand.u32 %v61, 4294901760
    %v682 = vsub.f32 %v61, %v681
    %683 = vmatmul.f32.gmra.mxu0 %v682
    %v684 = vpop.f32.mrf.mxu0
    %v685 = vadd.f32 %v626, %v684
    %686 = vdwg.mxu0
    %v687 = vand.u32 %v93, 4294901760
    %688 = vmatpush.msra.mxu0 %v687
    %v689 = vand.u32 %v91, 4294901760
    %690 = vmatpush.msra.mxu0 %v689
    %v691 = vand.u32 %v89, 4294901760
    %692 = vmatpush.msra.mxu0 %v691
    %v693 = vand.u32 %v87, 4294901760
    %694 = vmatpush.msra.mxu0 %v693
    %v695 = vand.u32 %v85, 4294901760
    %696 = vmatpush.msra.mxu0 %v695
    %v697 = vand.u32 %v83, 4294901760
    %698 = vmatpush.msra.mxu0 %v697
    %v699 = vand.u32 %v81, 4294901760
    %700 = vmatpush.msra.mxu0 %v699
    %v701 = vand.u32 %v79, 4294901760
    %702 = vmatpush.msra.mxu0 %v701
    %v703 = vand.u32 %v77, 4294901760
    %704 = vmatpush.msra.mxu0 %v703
    %v705 = vand.u32 %v75, 4294901760
    %706 = vmatpush.msra.mxu0 %v705
    %v707 = vand.u32 %v73, 4294901760
    %708 = vmatpush.msra.mxu0 %v707
    %v709 = vand.u32 %v71, 4294901760
    %710 = vmatpush.msra.mxu0 %v709
    %v711 = vand.u32 %v69, 4294901760
    %712 = vmatpush.msra.mxu0 %v711
    %v713 = vand.u32 %v67, 4294901760
    %714 = vmatpush.msra.mxu0 %v713
    %v715 = vand.u32 %v65, 4294901760
    %716 = vmatpush.msra.mxu0 %v715
    %v717 = vand.u32 %v63, 4294901760
    %718 = vmatpush.msra.mxu0 %v717
    %v719 = vand.u32 %v60, 4294901760
    %v720 = vsub.f32 %v60, %v719
    %v721 = vand.u32 %v720, 4294901760
    %722 = vmatmul.f32.gmra.mxu0 %v721
    %v723 = vpop.f32.mrf.mxu0
    %v724 = vadd.f32 %v680, %v723
    %v725 = vand.u32 %v61, 4294901760
    %v726 = vsub.f32 %v61, %v725
    %v727 = vand.u32 %v726, 4294901760
    %728 = vmatmul.f32.gmra.mxu0 %v727
    %v729 = vpop.f32.mrf.mxu0
    %v730 = vadd.f32 %v685, %v729
    %731 = vdwg.mxu0
    %v732 = vand.u32 %v93, 4294901760
    %v733 = vsub.f32 %v93, %v732
    %v734 = vand.u32 %v733, 4294901760
    %735 = vmatpush.msra.mxu0 %v734
    %v736 = vand.u32 %v91, 4294901760
    %v737 = vsub.f32 %v91, %v736
    %v738 = vand.u32 %v737, 4294901760
    %739 = vmatpush.msra.mxu0 %v738
    %v740 = vand.u32 %v89, 4294901760
    %v741 = vsub.f32 %v89, %v740
    %v742 = vand.u32 %v741, 4294901760
    %743 = vmatpush.msra.mxu0 %v742
    %v744 = vand.u32 %v87, 4294901760
    %v745 = vsub.f32 %v87, %v744
    %v746 = vand.u32 %v745, 4294901760
    %747 = vmatpush.msra.mxu0 %v746
    %v748 = vand.u32 %v85, 4294901760
    %v749 = vsub.f32 %v85, %v748
    %v750 = vand.u32 %v749, 4294901760
    %751 = vmatpush.msra.mxu0 %v750
    %v752 = vand.u32 %v83, 4294901760
    %v753 = vsub.f32 %v83, %v752
    %v754 = vand.u32 %v753, 4294901760
    %755 = vmatpush.msra.mxu0 %v754
    %v756 = vand.u32 %v81, 4294901760
    %v757 = vsub.f32 %v81, %v756
    %v758 = vand.u32 %v757, 4294901760
    %759 = vmatpush.msra.mxu0 %v758
    %v760 = vand.u32 %v79, 4294901760
    %v761 = vsub.f32 %v79, %v760
    %v762 = vand.u32 %v761, 4294901760
    %763 = vmatpush.msra.mxu0 %v762
    %v764 = vand.u32 %v77, 4294901760
    %v765 = vsub.f32 %v77, %v764
    %v766 = vand.u32 %v765, 4294901760
    %767 = vmatpush.msra.mxu0 %v766
    %v768 = vand.u32 %v75, 4294901760
    %v769 = vsub.f32 %v75, %v768
    %v770 = vand.u32 %v769, 4294901760
    %771 = vmatpush.msra.mxu0 %v770
    %v772 = vand.u32 %v73, 4294901760
    %v773 = vsub.f32 %v73, %v772
    %v774 = vand.u32 %v773, 4294901760
    %775 = vmatpush.msra.mxu0 %v774
    %v776 = vand.u32 %v71, 4294901760
    %v777 = vsub.f32 %v71, %v776
    %v778 = vand.u32 %v777, 4294901760
    %779 = vmatpush.msra.mxu0 %v778
    %v780 = vand.u32 %v69, 4294901760
    %v781 = vsub.f32 %v69, %v780
    %v782 = vand.u32 %v781, 4294901760
    %783 = vmatpush.msra.mxu0 %v782
    %v784 = vand.u32 %v67, 4294901760
    %v785 = vsub.f32 %v67, %v784
    %v786 = vand.u32 %v785, 4294901760
    %787 = vmatpush.msra.mxu0 %v786
    %v788 = vand.u32 %v65, 4294901760
    %v789 = vsub.f32 %v65, %v788
    %v790 = vand.u32 %v789, 4294901760
    %791 = vmatpush.msra.mxu0 %v790
    %v792 = vand.u32 %v63, 4294901760
    %v793 = vsub.f32 %v63, %v792
    %v794 = vand.u32 %v793, 4294901760
    %795 = vmatpush.msra.mxu0 %v794
    %v796 = vand.u32 %v60, 4294901760
    %797 = vmatmul.f32.gmra.mxu0 %v796
    %v798 = vpop.f32.mrf.mxu0
    %v799 = vadd.f32 %v724, %v798
    %v800 = vand.u32 %v61, 4294901760
    %801 = vmatmul.f32.gmra.mxu0 %v800
    %v802 = vpop.f32.mrf.mxu0
    %v803 = vadd.f32 %v730, %v802
    %804 = vdwg.mxu0
    %v805 = vand.u32 %v93, 4294901760
    %806 = vmatpush.msra.mxu0 %v805
    %v807 = vand.u32 %v91, 4294901760
    %808 = vmatpush.msra.mxu0 %v807
    %v809 = vand.u32 %v89, 4294901760
    %810 = vmatpush.msra.mxu0 %v809
    %v811 = vand.u32 %v87, 4294901760
    %812 = vmatpush.msra.mxu0 %v811
    %v813 = vand.u32 %v85, 4294901760
    %814 = vmatpush.msra.mxu0 %v813
    %v815 = vand.u32 %v83, 4294901760
    %816 = vmatpush.msra.mxu0 %v815
    %v817 = vand.u32 %v81, 4294901760
    %818 = vmatpush.msra.mxu0 %v817
    %v819 = vand.u32 %v79, 4294901760
    %820 = vmatpush.msra.mxu0 %v819
    %v821 = vand.u32 %v77, 4294901760
    %822 = vmatpush.msra.mxu0 %v821
    %v823 = vand.u32 %v75, 4294901760
    %824 = vmatpush.msra.mxu0 %v823
    %v825 = vand.u32 %v73, 4294901760
    %826 = vmatpush.msra.mxu0 %v825
    %v827 = vand.u32 %v71, 4294901760
    %828 = vmatpush.msra.mxu0 %v827
    %v829 = vand.u32 %v69, 4294901760
    %830 = vmatpush.msra.mxu0 %v829
    %v831 = vand.u32 %v67, 4294901760
    %832 = vmatpush.msra.mxu0 %v831
    %v833 = vand.u32 %v65, 4294901760
    %834 = vmatpush.msra.mxu0 %v833
    %v835 = vand.u32 %v63, 4294901760
    %836 = vmatpush.msra.mxu0 %v835
    %v837 = vand.u32 %v60, 4294901760
    %838 = vmatmul.f32.gmra.mxu0 %v837
    %v839 = vpop.f32.mrf.mxu0
    %v840 = vadd.f32 %v799, %v839
    %v841 = vand.u32 %v61, 4294901760
    %842 = vmatmul.f32.gmra.mxu0 %v841
    %v843 = vpop.f32.mrf.mxu0
    %v844 = vadd.f32 %v803, %v843
    %845 = vdwg.mxu0
    %v846 = vadd.f32 %v468, %v840
    %847 = vadd.xlane.f32.xlu0 %v846
    %v848 = vpop.xlane.xlu0 %847
    %v849 = vadd.f32 %v472, %v844
    %850 = vadd.xlane.f32.xlu0 %v849
    %v851 = vpop.xlane.xlu0 %850
    %v852 = vmul.f32 %v848, 0.00390625
    %v853 = vmul.f32 %v851, 0.00390625
    %v854 = vsub.f32 %v468, %v852
    %v855 = vsub.f32 %v840, %v852
    %v856 = vsub.f32 %v472, %v853
    %v857 = vsub.f32 %v844, %v853
    %v858 = vmul.f32 %v854, %v854
    %v859 = vmul.f32 %v855, %v855
    %v860 = vmul.f32 %v856, %v856
    %v861 = vmul.f32 %v857, %v857
    %v862 = vadd.f32 %v858, %v859
    %863 = vadd.xlane.f32.xlu0 %v862
    %v864 = vpop.xlane.xlu0 %863
    %v865 = vadd.f32 %v860, %v861
    %866 = vadd.xlane.f32.xlu0 %v865
    %v867 = vpop.xlane.xlu0 %866
    %v868 = vmul.f32 %v864, 0.00390625
    %v869 = vmul.f32 %v867, 0.00390625
    %v870 = vadd.f32 %v868, 1e-12
    %v871 = vadd.f32 %v869, 1e-12
    %v872 = vrsqrt.pop %v870
    %v873 = vmul.f32 %v872, %v870
    %v874 = vmul.f32 %v873, %v872
    %v875 = vmul.f32 0.5, %v874
    %v876 = vsub.f32 1.5, %v875
    %v877 = vmul.f32 %v872, %v876
    %vm878 = vweird.f32 %v870
    %vm879 = vweird.f32 %v872
    %vm880 = vmor %vm878, %vm879
    %v881 = vsel %vm880, %v872, %v877
    %v882 = vrsqrt.pop %v871
    %v883 = vmul.f32 %v882, %v871
    %v884 = vmul.f32 %v883, %v882
    %v885 = vmul.f32 0.5, %v884
    %v886 = vsub.f32 1.5, %v885
    %v887 = vmul.f32 %v882, %v886
    %vm888 = vweird.f32 %v871
    %vm889 = vweird.f32 %v882
    %vm890 = vmor %vm888, %vm889
    %v891 = vsel %vm890, %v882, %v887
    %v892 = vmul.f32 %v854, %v881
    %v893 = vmul.f32 %v855, %v881
    %v894 = vmul.f32 %v856, %v891
    %v895 = vmul.f32 %v857, %v891
    %v896 = vperm.slane %v94, 1
    %v897 = vperm.slane %v94, 5
    %v900 = vperm.slane %v896, 1
    %v901 = vperm.slane %v897, 1
    %v902 = vmul.f32 %v892, %v900
    %v903 = vmul.f32 %v893, %v901
    %v904 = vmul.f32 %v894, %v900
    %v905 = vmul.f32 %v895, %v901
    %v906 = vperm.slane %v94, 2
    %v907 = vperm.slane %v94, 6
    %v910 = vperm.slane %v906, 2
    %v911 = vperm.slane %v907, 2
    %v912 = vadd.f32 %v902, %v910
    %v913 = vadd.f32 %v903, %v911
    %v914 = vadd.f32 %v904, %v910
    %v915 = vadd.f32 %v905, %v911
    %916 = vst [vmem:[#allocation8] sm:$0xff] %v912
    %917 = vst [vmem:[#allocation8 + $0x8] sm:$0xff] %v913
    %918 = vst [vmem:[#allocation8 + $0x10] sm:$0xff] %v914
    %919 = vst [vmem:[#allocation8 + $0x18] sm:$0xff] %v915
    // Predicated region
    $region26: #{tpu_custom_call.1} parent=1 // pred_check
      _
    $region27: #{tpu_custom_call.1} parent=1 // pred_check_branch
      %921 = sbr.rel (0) target = $region29
    $region28: #{tpu_custom_call.1} parent=1 // pred_region
      %923 = vsyncadd [#allocation4], 0
      %s924 = sshll.u32 [#allocation8], 4
      %s925 = int_to_ptr.vmem [resolvable:$true] %s924
      %s926 = sshll.u32 %s3, 4
      %s927 = int_to_ptr.hbm [resolvable:$true] %s926
      %932 = dma.vmem_to_hbm [thread:$0]  %s925, 512, %s927, [#allocation4], 256, 256, 16
    $region29: #{tpu_custom_call.1} parent=1 // pred_fallthru
      _
    // Predicated region
    $region30: #{tpu_custom_call.1} parent=1 // pred_check
      _
    $region31: #{tpu_custom_call.1} parent=1 // pred_check_branch
      %934 = sbr.rel (0) target = $region33
    $region32: #{tpu_custom_call.1} parent=1 // pred_region
      %936 = dma.done [#allocation4], 512
    $region33: #{tpu_custom_call.1} parent=1 // pred_fallthru
      _
    %937 = vsyncpa [#allocation3], 1
    %938 = vsyncpa [#allocation6], 1
    %939 = vsyncpa [#allocation4], 1

</llo_original>
